<compile_context>
chip_gen: v7x
topology: tpu7x:2x2x1
jax: 0.10.0
libtpu: 0.0.40
codegen_flags: <defaults>
</compile_context>

<pallas_src>
import functools
import math

import jax
import jax.numpy as jnp
from jax.experimental import pallas as pl
from jax.experimental.pallas import tpu as pltpu


def _gating_kernel(coord_ref, dist_ref, w1a_ref, w1b_ref, b1_ref,
                   w2_ref, b2_ref, out_ref):
    coord = coord_ref[...]                      # (tm, k*D), storage dtype
    dist = dist_ref[...]                        # (tm, k*D)
    mxu_dtype = w1a_ref.dtype                   # bf16 by default

    # Layer 1: concat([coord, dist]) @ W1 + b1 as two bf16 MXU matmuls, f32 acc.
    h = (jnp.dot(coord.astype(mxu_dtype), w1a_ref[...],
                 preferred_element_type=jnp.float32)
         + jnp.dot(dist.astype(mxu_dtype), w1b_ref[...],
                   preferred_element_type=jnp.float32)
         + b1_ref[...])                         # (tm, k*2D), f32
    h = jnp.maximum(h, 0.0)                     # ReLU (VPU)

    # Layer 2: lane-replicated W2 -> the gate logit arrives already broadcast
    # across the D lanes of each (sub-)row.  bf16 operands, f32 accumulate.
    logit = jnp.dot(h.astype(mxu_dtype), w2_ref[...],
                    preferred_element_type=jnp.float32) + b2_ref[0]

    # sigmoid = 1 / (1 + exp(-x)); exp and reciprocal both use the EUP slot.
    g = pl.reciprocal(1.0 + jnp.exp(-logit), approx=True)

    # Gate combine in f32 vregs: out = dist + g * (coord - dist).
    cf = coord.astype(jnp.float32)
    df = dist.astype(jnp.float32)
    out_ref[...] = (df + g * (cf - df)).astype(out_ref.dtype)


def _fold_factor(embed_dim, max_folded_lanes=1024):
    """Rows packed per lane-row so k*D is a multiple of 128 (lane-dense I/O)."""
    if embed_dim % 128 == 0:
        return 1
    k = 128 // math.gcd(embed_dim, 128)
    if k * embed_dim > max_folded_lanes:
        return 1            # fold too wide -> plain layout (still correct)
    return k


def prepare_gating_params(w1, b1, w2, b2, *, compute_dtype=jnp.bfloat16):
    """One-time weight preprocessing, hoisted out of the per-call hot path.

    w1: (2D, 2D), b1: (2D,), w2: (2D, 1), b2: (1,) in (in, out) layout, i.e.
    transposed relative to PyTorch nn.Linear's (out, in) weight convention.
    """
    two_d = w1.shape[0]
    D = two_d // 2
    k = _fold_factor(D)

    w1a = w1[:D, :]                             # multiplies coord
    w1b = w1[D:, :]                             # multiplies dist
    # Replicate w2 across D output lanes so layer 2 emits the logit broadcast.
    w2e = w2.reshape(two_d, 1) * jnp.ones((1, D), w2.dtype)

    if k > 1:
        eye = jnp.eye(k, dtype=w1.dtype)
        w1a = jnp.kron(eye, w1a)                # (kD, 2kD) block-diagonal
        w1b = jnp.kron(eye, w1b)                # (kD, 2kD)
        w2e = jnp.kron(eye, w2e)                # (2kD, kD)
        b1r = jnp.tile(b1, k).reshape(1, two_d * k)
    else:
        b1r = b1.reshape(1, two_d)

    return {
        "D": D,
        "k": k,
        "w1a": w1a.astype(compute_dtype),
        "w1b": w1b.astype(compute_dtype),
        "b1": b1r.astype(jnp.float32),
        "w2": w2e.astype(compute_dtype),
        "b2": b2.reshape(1).astype(jnp.float32),
    }


@functools.partial(jax.jit, static_argnames=("D", "k", "tm"))
def _contextual_gating(coord_feat, dist_feat, w1a, w1b, b1r, w2e, b2s,
                       *, D, k, tm):
    orig_shape = coord_feat.shape
    coord2d = coord_feat.reshape(-1, D)
    dist2d = dist_feat.reshape(-1, D)
    N = coord2d.shape[0]

    # Pad the row count up to a multiple of k (at most k-1 rows), then fold k
    # rows per lane-dense row (row-major reshape => no data movement).
    pad = (-N) % k
    if pad:
        coord2d = jnp.pad(coord2d, ((0, pad), (0, 0)))
        dist2d = jnp.pad(dist2d, ((0, pad), (0, 0)))
    Dk = D * k
    R = (N + pad) // k
    coordR = coord2d.reshape(R, Dk)
    distR = dist2d.reshape(R, Dk)

    in_item = jnp.dtype(coord_feat.dtype).itemsize
    w_item = jnp.dtype(w1a.dtype).itemsize

    def vmem_bytes(t):
        return (2 * 2 * t * Dk * in_item        # coord/dist inputs, dbl-buffered
                + 2 * t * Dk * in_item          # output, dbl-buffered
                + 2 * t * 2 * Dk * 4            # f32 h / logit temporaries
                + 2 * (w1a.size + w1b.size + w2e.size) * w_item
                + 2 * b1r.size * 4)

    # Big row tile (amortizes the ~0.35us/grid-step cost), but keep >=2 grid
    # steps so both v7x TensorCores get work, and stay under ~40 MiB of VMEM so
    # the kernel also fits v7x's 64 MiB physical VMEM.
    if R <= 8:
        tm_eff = R
    else:
        tm_req = max(8, (tm // 8) * 8)
        half = ((-(-R // 2)) + 7) // 8 * 8
        tm_eff = max(8, min(tm_req, half))
        while tm_eff > 8 and vmem_bytes(tm_eff) > 40 * 1024 * 1024:
            tm_eff = max(8, (tm_eff // 16) * 8)
    grid = (pl.cdiv(R, tm_eff),)

    vmem_limit = int(min(max(int(1.5 * vmem_bytes(tm_eff)), 32 * 1024 * 1024),
                         48 * 1024 * 1024))

    out = pl.pallas_call(
        _gating_kernel,
        out_shape=jax.ShapeDtypeStruct((R, Dk), coord_feat.dtype),
        grid_spec=pltpu.PrefetchScalarGridSpec(
            num_scalar_prefetch=0,
            grid=grid,
            in_specs=[
                pl.BlockSpec((tm_eff, Dk), lambda i: (i, 0)),       # coord rows
                pl.BlockSpec((tm_eff, Dk), lambda i: (i, 0)),       # dist rows
                pl.BlockSpec((Dk, 2 * Dk), lambda i: (0, 0)),       # W1 top (block-diag)
                pl.BlockSpec((Dk, 2 * Dk), lambda i: (0, 0)),       # W1 bottom
                pl.BlockSpec((1, 2 * Dk), lambda i: (0, 0)),        # b1 row
                pl.BlockSpec((2 * Dk, Dk), lambda i: (0, 0)),       # expanded W2
                pl.BlockSpec(memory_space=pltpu.MemorySpace.SMEM),  # b2 scalar
            ],
            out_specs=pl.BlockSpec((tm_eff, Dk), lambda i: (i, 0)),
        ),
        compiler_params=pltpu.CompilerParams(
            dimension_semantics=("parallel",),
            vmem_limit_bytes=vmem_limit,
        ),
    )(coordR, distR, w1a, w1b, b1r, w2e, b2s)

    out2d = out.reshape(R * k, D)
    if pad:
        out2d = out2d[:N]
    return out2d.reshape(orig_shape)


def contextual_gating(coord_feat, dist_feat, params, *, tm=2048):
    """ContextualGating forward using params from prepare_gating_params()."""
    return _contextual_gating(
        coord_feat, dist_feat,
        params["w1a"], params["w1b"], params["b1"], params["w2"], params["b2"],
        D=params["D"], k=params["k"], tm=tm)


def _reference(coord_feat, dist_feat, w1, b1, w2, b2):
    combined = jnp.concatenate([coord_feat, dist_feat], axis=-1)
    h = jnp.maximum(combined @ w1 + b1, 0.0)
    g = jax.nn.sigmoid(h @ w2 + b2)
    return g * coord_feat + (1.0 - g) * dist_feat


if __name__ == "__main__":
    key = jax.random.PRNGKey(0)

    def run_case(batch, seq, embed_dim, subkey):
        ks = jax.random.split(subkey, 6)
        coord = jax.random.normal(ks[0], (batch, seq, embed_dim), jnp.float32)
        dist = jax.random.normal(ks[1], (batch, seq, embed_dim), jnp.float32)
        # Params stored as (in, out), i.e. transposed vs PyTorch's (out, in).
        w1 = jax.random.normal(ks[2], (2 * embed_dim, 2 * embed_dim), jnp.float32) * 0.1
        b1 = jax.random.normal(ks[3], (2 * embed_dim,), jnp.float32) * 0.1
        w2 = jax.random.normal(ks[4], (2 * embed_dim, 1), jnp.float32) * 0.1
        b2 = jax.random.normal(ks[5], (1,), jnp.float32) * 0.1

        params = prepare_gating_params(w1, b1, w2, b2)   # one-time prep
        out = jax.block_until_ready(contextual_gating(coord, dist, params))
        ref = _reference(coord, dist, w1, b1, w2, b2)
        assert out.shape == coord.shape
        err = float(jnp.max(jnp.abs(out - ref)))
        # bf16 MXU operands + approx reciprocal => loosened tolerance vs f32 ref.
        assert err < 5e-2, f"max abs err {err}"

    k1, k2 = jax.random.split(key)
    run_case(2, 16, 32, k1)   # D=32 -> fold k=4, Dk=128, no padding
    run_case(2, 7, 48, k2)    # D=48 -> fold k=8, Dk=384, row padding (14 -> 16)
    print("KERNEL_OK")
</pallas_src>

<mosaic_0001>
module attributes {stable_mosaic.version = 11 : i64} {
  func.func @_gating_kernel(%arg0: i32, %arg1: memref<8x128xf32, #tpu.memory_space<vmem>>, %arg2: memref<8x128xf32, #tpu.memory_space<vmem>>, %arg3: memref<128x256xbf16, #tpu.memory_space<vmem>>, %arg4: memref<128x256xbf16, #tpu.memory_space<vmem>>, %arg5: memref<1x256xf32, #tpu.memory_space<vmem>>, %arg6: memref<256x128xbf16, #tpu.memory_space<vmem>>, %arg7: memref<1xf32, #tpu.memory_space<smem>>, %arg8: memref<8x128xf32, #tpu.memory_space<vmem>>) attributes {dimension_semantics = [#tpu.dimension_semantics<parallel>], iteration_bounds = array<i64: 1>, scalar_prefetch = 0 : i64, scratch_operands = 0 : i64, tpu.core_type = #tpu.core_type<tc>, window_params = [{transform_indices = @transform_0, window_bounds = array<i64: 8, 128>}, {transform_indices = @transform_1, window_bounds = array<i64: 8, 128>}, {pipeline_mode = #tpu.pipeline_mode<synchronous>, transform_indices = @transform_2, window_bounds = array<i64: 128, 256>}, {pipeline_mode = #tpu.pipeline_mode<synchronous>, transform_indices = @transform_3, window_bounds = array<i64: 128, 256>}, {pipeline_mode = #tpu.pipeline_mode<synchronous>, transform_indices = @transform_4, window_bounds = array<i64: 1, 256>}, {pipeline_mode = #tpu.pipeline_mode<synchronous>, transform_indices = @transform_5, window_bounds = array<i64: 256, 128>}, {transform_indices = @transform_6, window_bounds = array<i64: 1>}, {transform_indices = @transform_7, window_bounds = array<i64: 8, 128>}]} {
    %c0 = arith.constant 0 : index
    %c0_0 = arith.constant 0 : index
    %0 = vector.load %arg1[%c0, %c0_0] : memref<8x128xf32, #tpu.memory_space<vmem>>, vector<8x128xf32>
    %c0_1 = arith.constant 0 : index
    %c0_2 = arith.constant 0 : index
    %1 = vector.load %arg2[%c0_1, %c0_2] : memref<8x128xf32, #tpu.memory_space<vmem>>, vector<8x128xf32>
    %2 = arith.truncf %0 : vector<8x128xf32> to vector<8x128xbf16>
    %c0_3 = arith.constant 0 : index
    %c0_4 = arith.constant 0 : index
    %3 = vector.load %arg3[%c0_3, %c0_4] : memref<128x256xbf16, #tpu.memory_space<vmem>>, vector<128x256xbf16>
    %cst = arith.constant dense<0.000000e+00> : vector<8x256xf32>
    %4 = tpu.matmul %2, %3, %cst {dimension_numbers = #tpu.dot_dimension_numbers<[1], [0], [0], [1], [0, 0, 1, 1], [], []>} : vector<8x128xbf16>, vector<128x256xbf16>, vector<8x256xf32> -> vector<8x256xf32>
    %5 = arith.truncf %1 : vector<8x128xf32> to vector<8x128xbf16>
    %c0_5 = arith.constant 0 : index
    %c0_6 = arith.constant 0 : index
    %6 = vector.load %arg4[%c0_5, %c0_6] : memref<128x256xbf16, #tpu.memory_space<vmem>>, vector<128x256xbf16>
    %cst_7 = arith.constant dense<0.000000e+00> : vector<8x256xf32>
    %7 = tpu.matmul %5, %6, %cst_7 {dimension_numbers = #tpu.dot_dimension_numbers<[1], [0], [0], [1], [0, 0, 1, 1], [], []>} : vector<8x128xbf16>, vector<128x256xbf16>, vector<8x256xf32> -> vector<8x256xf32>
    %8 = arith.addf %4, %7 : vector<8x256xf32>
    %c0_8 = arith.constant 0 : index
    %c0_9 = arith.constant 0 : index
    %9 = vector.load %arg5[%c0_8, %c0_9] : memref<1x256xf32, #tpu.memory_space<vmem>>, vector<1x256xf32>
    %10 = vector.broadcast %9 : vector<1x256xf32> to vector<8x256xf32>
    %11 = arith.addf %8, %10 : vector<8x256xf32>
    %cst_10 = arith.constant 0.000000e+00 : f32
    %12 = vector.broadcast %cst_10 : f32 to vector<8x256xf32>
    %13 = arith.maximumf %11, %12 : vector<8x256xf32>
    %14 = arith.truncf %13 : vector<8x256xf32> to vector<8x256xbf16>
    %c0_11 = arith.constant 0 : index
    %c0_12 = arith.constant 0 : index
    %15 = vector.load %arg6[%c0_11, %c0_12] : memref<256x128xbf16, #tpu.memory_space<vmem>>, vector<256x128xbf16>
    %cst_13 = arith.constant dense<0.000000e+00> : vector<8x128xf32>
    %16 = tpu.matmul %14, %15, %cst_13 {dimension_numbers = #tpu.dot_dimension_numbers<[1], [0], [0], [1], [0, 0, 1, 1], [], []>} : vector<8x256xbf16>, vector<256x128xbf16>, vector<8x128xf32> -> vector<8x128xf32>
    %c0_14 = arith.constant 0 : index
    %17 = memref.load %arg7[%c0_14] : memref<1xf32, #tpu.memory_space<smem>>
    %18 = vector.broadcast %17 : f32 to vector<8x128xf32>
    %19 = arith.addf %16, %18 : vector<8x128xf32>
    %cst_15 = arith.constant 0.000000e+00 : f32
    %20 = vector.broadcast %cst_15 : f32 to vector<8x128xf32>
    %21 = arith.subf %20, %19 : vector<8x128xf32>
    %22 = math.exp %21 : vector<8x128xf32>
    %cst_16 = arith.constant 1.000000e+00 : f32
    %23 = vector.broadcast %cst_16 : f32 to vector<8x128xf32>
    %24 = arith.addf %23, %22 : vector<8x128xf32>
    %25 = tpu.reciprocal %24 {approx = true} : vector<8x128xf32> -> vector<8x128xf32>
    %26 = arith.subf %0, %1 : vector<8x128xf32>
    %27 = arith.mulf %25, %26 : vector<8x128xf32>
    %28 = arith.addf %1, %27 : vector<8x128xf32>
    %c0_17 = arith.constant 0 : index
    %c0_18 = arith.constant 0 : index
    %29 = vector.load %arg8[%c0_17, %c0_18] : memref<8x128xf32, #tpu.memory_space<vmem>>, vector<8x128xf32>
    tpu.vector_store %arg8[%c0_17, %c0_18], %28 {strides = array<i32>} : memref<8x128xf32, #tpu.memory_space<vmem>>, vector<8x128xf32>,
    return
  }
  func.func @transform_0(%arg0: i32) -> (i32, i32) {
    %c0_i32 = arith.constant 0 : i32
    %c0_i32_0 = arith.constant 0 : i32
    return %arg0, %c0_i32 : i32, i32
  }
  func.func @transform_1(%arg0: i32) -> (i32, i32) {
    %c0_i32 = arith.constant 0 : i32
    %c0_i32_0 = arith.constant 0 : i32
    return %arg0, %c0_i32 : i32, i32
  }
  func.func @transform_2(%arg0: i32) -> (i32, i32) {
    %c0_i32 = arith.constant 0 : i32
    %c0_i32_0 = arith.constant 0 : i32
    %c0_i32_1 = arith.constant 0 : i32
    return %c0_i32, %c0_i32_0 : i32, i32
  }
  func.func @transform_3(%arg0: i32) -> (i32, i32) {
    %c0_i32 = arith.constant 0 : i32
    %c0_i32_0 = arith.constant 0 : i32
    %c0_i32_1 = arith.constant 0 : i32
    return %c0_i32, %c0_i32_0 : i32, i32
  }
  func.func @transform_4(%arg0: i32) -> (i32, i32) {
    %c0_i32 = arith.constant 0 : i32
    %c0_i32_0 = arith.constant 0 : i32
    %c0_i32_1 = arith.constant 0 : i32
    return %c0_i32, %c0_i32_0 : i32, i32
  }
  func.func @transform_5(%arg0: i32) -> (i32, i32) {
    %c0_i32 = arith.constant 0 : i32
    %c0_i32_0 = arith.constant 0 : i32
    %c0_i32_1 = arith.constant 0 : i32
    return %c0_i32, %c0_i32_0 : i32, i32
  }
  func.func @transform_6(%arg0: i32) -> i32 {
    %c0_i32 = arith.constant 0 : i32
    %c0_i32_0 = arith.constant 0 : i32
    return %c0_i32 : i32
  }
  func.func @transform_7(%arg0: i32) -> (i32, i32) {
    %c0_i32 = arith.constant 0 : i32
    %c0_i32_0 = arith.constant 0 : i32
    return %arg0, %c0_i32 : i32, i32
  }
}

</mosaic_0001>

<llo_original>
// kernel: _contextual_gating.1
$region0: #{_contextual_gating.1}
  #allocation0 [shape = 'u32[]', space=smem, size = 0x4, offset = 0x4, fixed_abs, tag = 'smem constant byte address 0x4 - core index']
  #allocation1 [shape = 'u32[144,128]{1,0:T(1,128)}', space=vmem, size = 0x12000, scoped, tag = 'internal scratch']
  #allocation2 [shape = 'f32[1]{0:T(128)S(6)}', space=smem, size = 0x200, scoped, tag = 'scoped memory for _contextual_gating.1']
  %s0 = inlined_call_operand.vmem [shape: f32[8,128], index: 0, kind: input, shape index: {}]
  %s1 = inlined_call_operand.vmem [shape: f32[8,128], index: 1, kind: input, shape index: {}]
  %s2 = inlined_call_operand.hbm [shape: bf16[128,256], index: 2, kind: input, shape index: {}]
  %s3 = inlined_call_operand.hbm [shape: bf16[128,256], index: 3, kind: input, shape index: {}]
  %s4 = inlined_call_operand.vmem [shape: f32[1,256], index: 4, kind: input, shape index: {}]
  %s5 = inlined_call_operand.hbm [shape: bf16[256,128], index: 5, kind: input, shape index: {}]
  %s6 = inlined_call_operand.<no memory space> [shape: f32[1], index: 6, kind: input, shape index: {}]
  %s7 = inlined_call_operand.vmem [shape: f32[8,128], index: 7, kind: output, shape index: {}]
  %s8 = sld [smem:[#allocation0]]
  $region50: #{_contextual_gating.1} parent=0
    _
  %s10 = ssub.s32 1, %s8
  %s11 = scalar_select 0, %s10, %s8
  %12 = sst [smem:[#allocation2]] %s6
  $region1: #{_contextual_gating.1} parent=0
    #allocation3 [shape = 'u8[65536]{0}', space=vmem, size = 0x10000, scoped, tag = 'input window, operand 2, single buffered']
    #allocation4 [shape = 's32[1]{0}', space=sflag, size = 0x4, scoped, tag = 'scoped memory for _contextual_gating.1']
    #allocation5 [shape = 'u8[65536]{0}', space=vmem, size = 0x10000, scoped, tag = 'input window, operand 3, single buffered']
    #allocation6 [shape = 's32[1]{0}', space=sflag, size = 0x4, scoped, tag = 'scoped memory for _contextual_gating.1']
    #allocation7 [shape = 'u8[65536]{0}', space=vmem, size = 0x10000, scoped, tag = 'input window, operand 5, single buffered']
    %13 = vsyncpa [#allocation4], 0
    %14 = vsyncpa [#allocation6], 0
    // Predicated region
    $region2: #{_contextual_gating.1} parent=1 // pred_check
      _
    $region3: #{_contextual_gating.1} parent=1 // pred_check_branch
      %16 = sbr.rel (0) target = $region5
    $region4: #{_contextual_gating.1} parent=1 // pred_region
      _
    $region5: #{_contextual_gating.1} parent=1 // pred_fallthru
      _
    // Predicated region
    $region6: #{_contextual_gating.1} parent=1 // pred_check
      _
    $region7: #{_contextual_gating.1} parent=1 // pred_check_branch
      %18 = sbr.rel (0) target = $region9
    $region8: #{_contextual_gating.1} parent=1 // pred_region
      _
    $region9: #{_contextual_gating.1} parent=1 // pred_fallthru
      _
    // Predicated region
    $region10: #{_contextual_gating.1} parent=1 // pred_check
      _
    $region11: #{_contextual_gating.1} parent=1 // pred_check_branch
      %20 = sbr.rel (0) target = $region13
    $region12: #{_contextual_gating.1} parent=1 // pred_region
      %s22 = ssub.s32 2048, 2048
      %23 = vsyncadd [#allocation4], %s22
      %s24 = sshll.u32 [#allocation3], 4
      %s25 = int_to_ptr.vmem [resolvable:$true] %s24
      %30 = dma.hbm_to_vmem [thread:$0]  %s2, 2048, %s25, [#allocation4], 128, 128, 8
    $region13: #{_contextual_gating.1} parent=1 // pred_fallthru
      _
    // Predicated region
    $region14: #{_contextual_gating.1} parent=1 // pred_check
      _
    $region15: #{_contextual_gating.1} parent=1 // pred_check_branch
      %32 = sbr.rel (0) target = $region17
    $region16: #{_contextual_gating.1} parent=1 // pred_region
      %s34 = ssub.s32 2048, 2048
      %35 = vsyncadd [#allocation6], %s34
      %s36 = sshll.u32 [#allocation5], 4
      %s37 = int_to_ptr.vmem [resolvable:$true] %s36
      %42 = dma.hbm_to_vmem [thread:$0]  %s3, 2048, %s37, [#allocation6], 128, 128, 8
    $region17: #{_contextual_gating.1} parent=1 // pred_fallthru
      _
    // Predicated region
    $region18: #{_contextual_gating.1} parent=1 // pred_check
      _
    $region19: #{_contextual_gating.1} parent=1 // pred_check_branch
      %44 = sbr.rel (0) target = $region21
    $region20: #{_contextual_gating.1} parent=1 // pred_region
      _
    $region21: #{_contextual_gating.1} parent=1 // pred_fallthru
      _
    // Predicated region
    $region22: #{_contextual_gating.1} parent=1 // pred_check
      _
    $region23: #{_contextual_gating.1} parent=1 // pred_check_branch
      %46 = sbr.rel (0) target = $region25
    $region24: #{_contextual_gating.1} parent=1 // pred_region
      %s48 = ssub.s32 2048, 2048
      %49 = vsyncadd [#allocation6], %s48
      %s50 = sshll.u32 [#allocation7], 4
      %s51 = int_to_ptr.vmem [resolvable:$true] %s50
      %56 = dma.hbm_to_vmem [thread:$0]  %s5, 2048, %s51, [#allocation6], 64, 64, 4
    $region25: #{_contextual_gating.1} parent=1 // pred_fallthru
      _
    // Predicated region
    $region26: #{_contextual_gating.1} parent=1 // pred_check
      _
    $region27: #{_contextual_gating.1} parent=1 // pred_check_branch
      %58 = sbr.rel (0) target = $region29
    $region28: #{_contextual_gating.1} parent=1 // pred_region
      _
    $region29: #{_contextual_gating.1} parent=1 // pred_fallthru
      _
    // Predicated region
    $region30: #{_contextual_gating.1} parent=1 // pred_check
      _
    $region31: #{_contextual_gating.1} parent=1 // pred_check_branch
      %60 = sbr.rel (0) target = $region33
    $region32: #{_contextual_gating.1} parent=1 // pred_region
      %61 = dma.done [#allocation4], 2048
    $region33: #{_contextual_gating.1} parent=1 // pred_fallthru
      _
    // Predicated region
    $region34: #{_contextual_gating.1} parent=1 // pred_check
      _
    $region35: #{_contextual_gating.1} parent=1 // pred_check_branch
      %63 = sbr.rel (0) target = $region37
    $region36: #{_contextual_gating.1} parent=1 // pred_region
      %64 = dma.done [#allocation6], 2048
    $region37: #{_contextual_gating.1} parent=1 // pred_fallthru
      _
    // Predicated region
    $region38: #{_contextual_gating.1} parent=1 // pred_check
      _
    $region39: #{_contextual_gating.1} parent=1 // pred_check_branch
      %66 = sbr.rel (0) target = $region41
    $region40: #{_contextual_gating.1} parent=1 // pred_region
      %67 = dma.done [#allocation6], 2048
    $region41: #{_contextual_gating.1} parent=1 // pred_fallthru
      _
    %v69 = vld [vmem:[%s0] sm:$0xff]
    %v70 = vld [vmem:[%s1] sm:$0xff]
    %v71 = vpack.c.bf16 %v69, %v69
    %v72 = vld [vmem:[#allocation3] sm:$0xff]
    %v73 = vld [vmem:[#allocation3 + $0x8] sm:$0xff]
    %v74 = vld [vmem:[#allocation3 + $0x10] sm:$0xff]
    %v75 = vld [vmem:[#allocation3 + $0x18] sm:$0xff]
    %v76 = vld [vmem:[#allocation3 + $0x20] sm:$0xff]
    %v77 = vld [vmem:[#allocation3 + $0x28] sm:$0xff]
    %v78 = vld [vmem:[#allocation3 + $0x30] sm:$0xff]
    %v79 = vld [vmem:[#allocation3 + $0x38] sm:$0xff]
    %v80 = vld [vmem:[#allocation3 + $0x40] sm:$0xff]
    %v81 = vld [vmem:[#allocation3 + $0x48] sm:$0xff]
    %v82 = vld [vmem:[#allocation3 + $0x50] sm:$0xff]
    %v83 = vld [vmem:[#allocation3 + $0x58] sm:$0xff]
    %v84 = vld [vmem:[#allocation3 + $0x60] sm:$0xff]
    %v85 = vld [vmem:[#allocation3 + $0x68] sm:$0xff]
    %v86 = vld [vmem:[#allocation3 + $0x70] sm:$0xff]
    %v87 = vld [vmem:[#allocation3 + $0x78] sm:$0xff]
    %v88 = vpack.c.bf16 %v70, %v70
    %v89 = vld [vmem:[#allocation5] sm:$0xff]
    %v90 = vld [vmem:[#allocation5 + $0x8] sm:$0xff]
    %v91 = vld [vmem:[#allocation5 + $0x10] sm:$0xff]
    %v92 = vld [vmem:[#allocation5 + $0x18] sm:$0xff]
    %v93 = vld [vmem:[#allocation5 + $0x20] sm:$0xff]
    %v94 = vld [vmem:[#allocation5 + $0x28] sm:$0xff]
    %v95 = vld [vmem:[#allocation5 + $0x30] sm:$0xff]
    %v96 = vld [vmem:[#allocation5 + $0x38] sm:$0xff]
    %v97 = vld [vmem:[#allocation5 + $0x40] sm:$0xff]
    %v98 = vld [vmem:[#allocation5 + $0x48] sm:$0xff]
    %v99 = vld [vmem:[#allocation5 + $0x50] sm:$0xff]
    %v100 = vld [vmem:[#allocation5 + $0x58] sm:$0xff]
    %v101 = vld [vmem:[#allocation5 + $0x60] sm:$0xff]
    %v102 = vld [vmem:[#allocation5 + $0x68] sm:$0xff]
    %v103 = vld [vmem:[#allocation5 + $0x70] sm:$0xff]
    %v104 = vld [vmem:[#allocation5 + $0x78] sm:$0xff]
    %v121 = vunpack.c.l.b16 %v89
    %v122 = vunpack.c.h.b16 %v89
    %v123 = vunpack.c.l.b16 %v90
    %v124 = vunpack.c.h.b16 %v90
    %v125 = vunpack.c.l.b16 %v91
    %v126 = vunpack.c.h.b16 %v91
    %v127 = vunpack.c.l.b16 %v92
    %v128 = vunpack.c.h.b16 %v92
    %v129 = vunpack.c.l.b16 %v93
    %v130 = vunpack.c.h.b16 %v93
    %v131 = vunpack.c.l.b16 %v94
    %v132 = vunpack.c.h.b16 %v94
    %v133 = vunpack.c.l.b16 %v95
    %v134 = vunpack.c.h.b16 %v95
    %v135 = vunpack.c.l.b16 %v96
    %v136 = vunpack.c.h.b16 %v96
    %v137 = vunpack.c.l.b16 %v97
    %v138 = vunpack.c.h.b16 %v97
    %v139 = vunpack.c.l.b16 %v98
    %v140 = vunpack.c.h.b16 %v98
    %v141 = vunpack.c.l.b16 %v99
    %v142 = vunpack.c.h.b16 %v99
    %v143 = vunpack.c.l.b16 %v100
    %v144 = vunpack.c.h.b16 %v100
    %v145 = vunpack.c.l.b16 %v101
    %v146 = vunpack.c.h.b16 %v101
    %v147 = vunpack.c.l.b16 %v102
    %v148 = vunpack.c.h.b16 %v102
    %v149 = vunpack.c.l.b16 %v103
    %v150 = vunpack.c.h.b16 %v103
    %v151 = vunpack.c.l.b16 %v104
    %v152 = vunpack.c.h.b16 %v104
    %v153 = vpack.c.b16 %v123, %v121
    %v154 = vpack.c.b16 %v124, %v122
    %v155 = vpack.c.b16 %v127, %v125
    %v156 = vpack.c.b16 %v128, %v126
    %v157 = vpack.c.b16 %v131, %v129
    %v158 = vpack.c.b16 %v132, %v130
    %v159 = vpack.c.b16 %v135, %v133
    %v160 = vpack.c.b16 %v136, %v134
    %v161 = vpack.c.b16 %v139, %v137
    %v162 = vpack.c.b16 %v140, %v138
    %v163 = vpack.c.b16 %v143, %v141
    %v164 = vpack.c.b16 %v144, %v142
    %v165 = vpack.c.b16 %v147, %v145
    %v166 = vpack.c.b16 %v148, %v146
    %v167 = vpack.c.b16 %v151, %v149
    %v168 = vpack.c.b16 %v152, %v150
    %185 = vmatprep.subr.bf16.mxu0 %v154
    %186 = vmatpush1.bf16.msra.mxu0 %v153
    %187 = vmatprep.subr.bf16.mxu0 %v156
    %188 = vmatpush1.bf16.msra.mxu0 %v155
    %189 = vmatprep.subr.bf16.mxu0 %v158
    %190 = vmatpush1.bf16.msra.mxu0 %v157
    %191 = vmatprep.subr.bf16.mxu0 %v160
    %192 = vmatpush1.bf16.msra.mxu0 %v159
    %193 = vmatprep.subr.bf16.mxu0 %v162
    %194 = vmatpush1.bf16.msra.mxu0 %v161
    %195 = vmatprep.subr.bf16.mxu0 %v164
    %196 = vmatpush1.bf16.msra.mxu0 %v163
    %197 = vmatprep.subr.bf16.mxu0 %v166
    %198 = vmatpush1.bf16.msra.mxu0 %v165
    %199 = vmatprep.subr.bf16.mxu0 %v168
    %200 = vmatpush1.bf16.msra.mxu0 %v167
    %201 = vmatprep.subr.bf16.mxu0 0
    %202 = vmatpush1.bf16.msra.mxu0 0
    %203 = vmatprep.subr.bf16.mxu0 0
    %204 = vmatpush1.bf16.msra.mxu0 0
    %205 = vmatprep.subr.bf16.mxu0 0
    %206 = vmatpush1.bf16.msra.mxu0 0
    %207 = vmatprep.subr.bf16.mxu0 0
    %208 = vmatpush1.bf16.msra.mxu0 0
    %209 = vmatprep.subr.bf16.mxu0 0
    %210 = vmatpush1.bf16.msra.mxu0 0
    %211 = vmatprep.subr.bf16.mxu0 0
    %212 = vmatpush1.bf16.msra.mxu0 0
    %213 = vmatprep.subr.bf16.mxu0 0
    %214 = vmatpush1.bf16.msra.mxu0 0
    %215 = vmatprep.subr.bf16.mxu0 0
    %216 = vmatpush1.bf16.msra.mxu0 0
    %217 = vmatprep.mubr.bf16.mxu0 0
    %218 = vmatmul.mubr.bf16.gmra.mrb[0].mxu0 %v88
    %v219 = vpop.f32.mrb[0].mxu0
    %v220 = vadd.f32 0.0, %v219
    %v221 = vpop.f32.mrb[0].mxu0
    %v222 = vadd.f32 0.0, %v221
    %v223 = vpop.f32.mrb[0].mxu0
    %v224 = vpop.f32.mrb[0].mxu0
    %225 = vdwg.mxu0
    %v242 = vunpack.c.l.b16 %v72
    %v243 = vunpack.c.h.b16 %v72
    %v244 = vunpack.c.l.b16 %v73
    %v245 = vunpack.c.h.b16 %v73
    %v246 = vunpack.c.l.b16 %v74
    %v247 = vunpack.c.h.b16 %v74
    %v248 = vunpack.c.l.b16 %v75
    %v249 = vunpack.c.h.b16 %v75
    %v250 = vunpack.c.l.b16 %v76
    %v251 = vunpack.c.h.b16 %v76
    %v252 = vunpack.c.l.b16 %v77
    %v253 = vunpack.c.h.b16 %v77
    %v254 = vunpack.c.l.b16 %v78
    %v255 = vunpack.c.h.b16 %v78
    %v256 = vunpack.c.l.b16 %v79
    %v257 = vunpack.c.h.b16 %v79
    %v258 = vunpack.c.l.b16 %v80
    %v259 = vunpack.c.h.b16 %v80
    %v260 = vunpack.c.l.b16 %v81
    %v261 = vunpack.c.h.b16 %v81
    %v262 = vunpack.c.l.b16 %v82
    %v263 = vunpack.c.h.b16 %v82
    %v264 = vunpack.c.l.b16 %v83
    %v265 = vunpack.c.h.b16 %v83
    %v266 = vunpack.c.l.b16 %v84
    %v267 = vunpack.c.h.b16 %v84
    %v268 = vunpack.c.l.b16 %v85
    %v269 = vunpack.c.h.b16 %v85
    %v270 = vunpack.c.l.b16 %v86
    %v271 = vunpack.c.h.b16 %v86
    %v272 = vunpack.c.l.b16 %v87
    %v273 = vunpack.c.h.b16 %v87
    %v274 = vpack.c.b16 %v244, %v242
    %v275 = vpack.c.b16 %v245, %v243
    %v276 = vpack.c.b16 %v248, %v246
    %v277 = vpack.c.b16 %v249, %v247
    %v278 = vpack.c.b16 %v252, %v250
    %v279 = vpack.c.b16 %v253, %v251
    %v280 = vpack.c.b16 %v256, %v254
    %v281 = vpack.c.b16 %v257, %v255
    %v282 = vpack.c.b16 %v260, %v258
    %v283 = vpack.c.b16 %v261, %v259
    %v284 = vpack.c.b16 %v264, %v262
    %v285 = vpack.c.b16 %v265, %v263
    %v286 = vpack.c.b16 %v268, %v266
    %v287 = vpack.c.b16 %v269, %v267
    %v288 = vpack.c.b16 %v272, %v270
    %v289 = vpack.c.b16 %v273, %v271
    %306 = vmatprep.subr.bf16.mxu0 %v275
    %307 = vmatpush1.bf16.msra.mxu0 %v274
    %308 = vmatprep.subr.bf16.mxu0 %v277
    %309 = vmatpush1.bf16.msra.mxu0 %v276
    %310 = vmatprep.subr.bf16.mxu0 %v279
    %311 = vmatpush1.bf16.msra.mxu0 %v278
    %312 = vmatprep.subr.bf16.mxu0 %v281
    %313 = vmatpush1.bf16.msra.mxu0 %v280
    %314 = vmatprep.subr.bf16.mxu0 %v283
    %315 = vmatpush1.bf16.msra.mxu0 %v282
    %316 = vmatprep.subr.bf16.mxu0 %v285
    %317 = vmatpush1.bf16.msra.mxu0 %v284
    %318 = vmatprep.subr.bf16.mxu0 %v287
    %319 = vmatpush1.bf16.msra.mxu0 %v286
    %320 = vmatprep.subr.bf16.mxu0 %v289
    %321 = vmatpush1.bf16.msra.mxu0 %v288
    %322 = vmatprep.subr.bf16.mxu0 0
    %323 = vmatpush1.bf16.msra.mxu0 0
    %324 = vmatprep.subr.bf16.mxu0 0
    %325 = vmatpush1.bf16.msra.mxu0 0
    %326 = vmatprep.subr.bf16.mxu0 0
    %327 = vmatpush1.bf16.msra.mxu0 0
    %328 = vmatprep.subr.bf16.mxu0 0
    %329 = vmatpush1.bf16.msra.mxu0 0
    %330 = vmatprep.subr.bf16.mxu0 0
    %331 = vmatpush1.bf16.msra.mxu0 0
    %332 = vmatprep.subr.bf16.mxu0 0
    %333 = vmatpush1.bf16.msra.mxu0 0
    %334 = vmatprep.subr.bf16.mxu0 0
    %335 = vmatpush1.bf16.msra.mxu0 0
    %336 = vmatprep.subr.bf16.mxu0 0
    %337 = vmatpush1.bf16.msra.mxu0 0
    %338 = vmatprep.mubr.bf16.mxu0 0
    %339 = vmatmul.mubr.bf16.gmra.mrb[0].mxu0 %v71
    %v340 = vpop.f32.mrb[0].mxu0
    %v341 = vadd.f32 %v220, %v340
    %v342 = vpop.f32.mrb[0].mxu0
    %v343 = vadd.f32 %v222, %v342
    %v344 = vpop.f32.mrb[0].mxu0
    %v345 = vpop.f32.mrb[0].mxu0
    %346 = vdwg.mxu0
    %v347 = vld [vmem:[%s4] sm:$0x3]
    %v349 = vlaneseq
    %v350 = vshrl.u32 %v349, 7
    %v351 = vsub.s32 0, %v350
    %v352 = vrot.slane %v347, %v351
    %v353 = vlaneseq
    %v354 = vshrl.u32 %v353, 7
    %v355 = vsub.s32 1, %v354
    %v356 = vrot.slane %v347, %v355
    %v359 = vadd.f32 %v341, %v352
    %v360 = vadd.f32 %v343, %v356
    %v361 = vmax.f32 %v359, 0.0
    %v362 = vmax.f32 %v360, 0.0
    %v363 = vpack.c.bf16 %v361, %v361
    %v364 = vpack.c.bf16 %v362, %v362
    %v365 = vld [vmem:[#allocation7] sm:$0xf]
    %v366 = vld [vmem:[#allocation7 + $0x4] sm:$0xf]
    %v367 = vld [vmem:[#allocation7 + $0x8] sm:$0xf]
    %v368 = vld [vmem:[#allocation7 + $0xc] sm:$0xf]
    %v369 = vld [vmem:[#allocation7 + $0x10] sm:$0xf]
    %v370 = vld [vmem:[#allocation7 + $0x14] sm:$0xf]
    %v371 = vld [vmem:[#allocation7 + $0x18] sm:$0xf]
    %v372 = vld [vmem:[#allocation7 + $0x1c] sm:$0xf]
    %v373 = vld [vmem:[#allocation7 + $0x20] sm:$0xf]
    %v374 = vld [vmem:[#allocation7 + $0x24] sm:$0xf]
    %v375 = vld [vmem:[#allocation7 + $0x28] sm:$0xf]
    %v376 = vld [vmem:[#allocation7 + $0x2c] sm:$0xf]
    %v377 = vld [vmem:[#allocation7 + $0x30] sm:$0xf]
    %v378 = vld [vmem:[#allocation7 + $0x34] sm:$0xf]
    %v379 = vld [vmem:[#allocation7 + $0x38] sm:$0xf]
    %v380 = vld [vmem:[#allocation7 + $0x3c] sm:$0xf]
    %v381 = vld [vmem:[#allocation7 + $0x40] sm:$0xf]
    %v382 = vld [vmem:[#allocation7 + $0x44] sm:$0xf]
    %v383 = vld [vmem:[#allocation7 + $0x48] sm:$0xf]
    %v384 = vld [vmem:[#allocation7 + $0x4c] sm:$0xf]
    %v385 = vld [vmem:[#allocation7 + $0x50] sm:$0xf]
    %v386 = vld [vmem:[#allocation7 + $0x54] sm:$0xf]
    %v387 = vld [vmem:[#allocation7 + $0x58] sm:$0xf]
    %v388 = vld [vmem:[#allocation7 + $0x5c] sm:$0xf]
    %v389 = vld [vmem:[#allocation7 + $0x60] sm:$0xf]
    %v390 = vld [vmem:[#allocation7 + $0x64] sm:$0xf]
    %v391 = vld [vmem:[#allocation7 + $0x68] sm:$0xf]
    %v392 = vld [vmem:[#allocation7 + $0x6c] sm:$0xf]
    %v393 = vld [vmem:[#allocation7 + $0x70] sm:$0xf]
    %v394 = vld [vmem:[#allocation7 + $0x74] sm:$0xf]
    %v395 = vld [vmem:[#allocation7 + $0x78] sm:$0xf]
    %v396 = vld [vmem:[#allocation7 + $0x7c] sm:$0xf]
    %s397 = sld [smem:[#allocation2]]
    %v398 = vstv %s397
    %v431 = vunpack.c.l.b16 %v365
    %v432 = vunpack.c.l.b16 %v366
    %v433 = vunpack.c.l.b16 %v367
    %v434 = vunpack.c.l.b16 %v368
    %v435 = vunpack.c.l.b16 %v369
    %v436 = vunpack.c.l.b16 %v370
    %v437 = vunpack.c.l.b16 %v371
    %v438 = vunpack.c.l.b16 %v372
    %v439 = vunpack.c.l.b16 %v373
    %v440 = vunpack.c.l.b16 %v374
    %v441 = vunpack.c.l.b16 %v375
    %v442 = vunpack.c.l.b16 %v376
    %v443 = vunpack.c.l.b16 %v377
    %v444 = vunpack.c.l.b16 %v378
    %v445 = vunpack.c.l.b16 %v379
    %v446 = vunpack.c.l.b16 %v380
    %v447 = vunpack.c.l.b16 %v381
    %v448 = vunpack.c.l.b16 %v382
    %v449 = vunpack.c.l.b16 %v383
    %v450 = vunpack.c.l.b16 %v384
    %v451 = vunpack.c.l.b16 %v385
    %v452 = vunpack.c.l.b16 %v386
    %v453 = vunpack.c.l.b16 %v387
    %v454 = vunpack.c.l.b16 %v388
    %v455 = vunpack.c.l.b16 %v389
    %v456 = vunpack.c.l.b16 %v390
    %v457 = vunpack.c.l.b16 %v391
    %v458 = vunpack.c.l.b16 %v392
    %v459 = vunpack.c.l.b16 %v393
    %v460 = vunpack.c.l.b16 %v394
    %v461 = vunpack.c.l.b16 %v395
    %v462 = vunpack.c.l.b16 %v396
    %v463 = vpack.c.b16 %v432, %v431
    %v464 = vpack.c.b16 %v434, %v433
    %v465 = vpack.c.b16 %v436, %v435
    %v466 = vpack.c.b16 %v438, %v437
    %v467 = vpack.c.b16 %v440, %v439
    %v468 = vpack.c.b16 %v442, %v441
    %v469 = vpack.c.b16 %v444, %v443
    %v470 = vpack.c.b16 %v446, %v445
    %v471 = vpack.c.b16 %v448, %v447
    %v472 = vpack.c.b16 %v450, %v449
    %v473 = vpack.c.b16 %v452, %v451
    %v474 = vpack.c.b16 %v454, %v453
    %v475 = vpack.c.b16 %v456, %v455
    %v476 = vpack.c.b16 %v458, %v457
    %v477 = vpack.c.b16 %v460, %v459
    %v478 = vpack.c.b16 %v462, %v461
    %495 = vmatprep.subr.bf16.mxu0 0
    %496 = vmatpush1.bf16.msra.mxu0 %v463
    %497 = vmatprep.subr.bf16.mxu0 0
    %498 = vmatpush1.bf16.msra.mxu0 %v464
    %499 = vmatprep.subr.bf16.mxu0 0
    %500 = vmatpush1.bf16.msra.mxu0 %v465
    %501 = vmatprep.subr.bf16.mxu0 0
    %502 = vmatpush1.bf16.msra.mxu0 %v466
    %503 = vmatprep.subr.bf16.mxu0 0
    %504 = vmatpush1.bf16.msra.mxu0 %v467
    %505 = vmatprep.subr.bf16.mxu0 0
    %506 = vmatpush1.bf16.msra.mxu0 %v468
    %507 = vmatprep.subr.bf16.mxu0 0
    %508 = vmatpush1.bf16.msra.mxu0 %v469
    %509 = vmatprep.subr.bf16.mxu0 0
    %510 = vmatpush1.bf16.msra.mxu0 %v470
    %511 = vmatprep.subr.bf16.mxu0 0
    %512 = vmatpush1.bf16.msra.mxu0 %v471
    %513 = vmatprep.subr.bf16.mxu0 0
    %514 = vmatpush1.bf16.msra.mxu0 %v472
    %515 = vmatprep.subr.bf16.mxu0 0
    %516 = vmatpush1.bf16.msra.mxu0 %v473
    %517 = vmatprep.subr.bf16.mxu0 0
    %518 = vmatpush1.bf16.msra.mxu0 %v474
    %519 = vmatprep.subr.bf16.mxu0 0
    %520 = vmatpush1.bf16.msra.mxu0 %v475
    %521 = vmatprep.subr.bf16.mxu0 0
    %522 = vmatpush1.bf16.msra.mxu0 %v476
    %523 = vmatprep.subr.bf16.mxu0 0
    %524 = vmatpush1.bf16.msra.mxu0 %v477
    %525 = vmatprep.subr.bf16.mxu0 0
    %526 = vmatpush1.bf16.msra.mxu0 %v478
    %527 = vmatprep.mubr.bf16.mxu0 %v364
    %528 = vmatmul.mubr.bf16.gmra.mrb[0].mxu0 %v363
    %v529 = vpop.f32.mrb[0].mxu0
    %v530 = vadd.f32 %v398, %v529
    %v531 = vpop.f32.mrb[0].mxu0
    %v532 = vpop.f32.mrb[0].mxu0
    %v533 = vpop.f32.mrb[0].mxu0
    %534 = vdwg.mxu0
    %v535 = vsub.f32 0.0, %v530
    %v536 = vmul.f32 %v535, 1.442695
    %v537 = vpow.pop %v536
    %v538 = vadd.f32 %v537, 1.0
    %v539 = vrcp.pop %v538
    %v540 = vsub.f32 %v69, %v70
    %v541 = vmul.f32 %v539, %v540
    %v542 = vadd.f32 %v70, %v541
    %543 = vst [vmem:[%s7] sm:$0xff] %v542
    // Predicated region
    $region42: #{_contextual_gating.1} parent=1 // pred_check
      _
    $region43: #{_contextual_gating.1} parent=1 // pred_check_branch
      %545 = sbr.rel (0) target = $region45
    $region44: #{_contextual_gating.1} parent=1 // pred_region
      _
    $region45: #{_contextual_gating.1} parent=1 // pred_fallthru
      _
    // Predicated region
    $region46: #{_contextual_gating.1} parent=1 // pred_check
      _
    $region47: #{_contextual_gating.1} parent=1 // pred_check_branch
      %547 = sbr.rel (0) target = $region49
    $region48: #{_contextual_gating.1} parent=1 // pred_region
      _
    $region49: #{_contextual_gating.1} parent=1 // pred_fallthru
      _
    %548 = vsyncpa [#allocation4], 1
    %549 = vsyncpa [#allocation6], 1

</llo_original>
